<compile_context>
chip_gen: v7x
topology: tpu7x:2x2x1
jax: 0.10.0
libtpu: 0.0.40
codegen_flags: <defaults>
</compile_context>

<pallas_src>
import jax
import jax.numpy as jnp
from jax.experimental import pallas as pl
from jax.experimental.pallas import tpu as pltpu


# ----------------------------- Pallas kernel --------------------------------

def _vsfc_kernel(x_ref, w1_ref, b1_ref, w2_ref, b2_ref, w3_ref, b3_ref, o_ref):
    # Fused MLP: relu(x@W1+b1) -> relu(.@W2+b2) -> .@W3+b3
    # MXU matmuls on bf16 operands with f32 accumulation; bias/ReLU in f32 (VPU).
    x = x_ref[...].astype(jnp.bfloat16)          # in-kernel cast (no HBM round-trip)
    h = jnp.dot(x, w1_ref[...], preferred_element_type=jnp.float32)
    h = jnp.maximum(h + b1_ref[...], 0.0)
    h = jnp.dot(h.astype(jnp.bfloat16), w2_ref[...],
                preferred_element_type=jnp.float32)
    h = jnp.maximum(h + b2_ref[...], 0.0)
    h = jnp.dot(h.astype(jnp.bfloat16), w3_ref[...],
                preferred_element_type=jnp.float32)
    o_ref[...] = h + b3_ref[...]


# ------------------------------- wrapper -------------------------------------

def _round_up(a, m):
    return (a + m - 1) // m * m


def _choose_tiling(b):
    """Return (tb, bp): row-tile size and (minimally) padded row count."""
    if b <= 256:
        # Single resident block: no padding, no copy (block rows == array rows).
        return b, b
    # >= 2 near-balanced tiles (dual-TC on v7x), each <= 1024 rows, rows aligned
    # to 16 (bf16 sublane packing). Padding waste is at most 16 rows per tile.
    n_tiles = max(2, pl.cdiv(b, 1024))
    tb = _round_up(pl.cdiv(b, n_tiles), 16)
    bp = _round_up(b, tb)
    return tb, bp


def _pallas_vsfc(xp, params, tb):
    bp, d_in = xp.shape
    w1, b1 = params["w1"], params["b1"]
    w2, b2 = params["w2"], params["b2"]
    w3, b3 = params["w3"], params["b3"]
    h1, h2, n_out = w1.shape[1], w2.shape[1], w3.shape[1]

    flops = 2 * bp * (d_in * h1 + h1 * h2 + h2 * n_out)
    bytes_accessed = (xp.size * 4 + bp * n_out * 4
                      + (w1.size + w2.size + w3.size) * 2
                      + (b1.size + b2.size + b3.size) * 4)

    return pl.pallas_call(
        _vsfc_kernel,
        out_shape=jax.ShapeDtypeStruct((bp, n_out), jnp.float32),
        grid_spec=pltpu.PrefetchScalarGridSpec(
            num_scalar_prefetch=0,
            grid=(bp // tb,),
            in_specs=[
                pl.BlockSpec((tb, d_in), lambda i: (i, 0)),   # activations: row-tiled
                pl.BlockSpec((d_in, h1), lambda i: (0, 0)),   # weights: VMEM-resident
                pl.BlockSpec((1, h1), lambda i: (0, 0)),
                pl.BlockSpec((h1, h2), lambda i: (0, 0)),
                pl.BlockSpec((1, h2), lambda i: (0, 0)),
                pl.BlockSpec((h2, n_out), lambda i: (0, 0)),
                pl.BlockSpec((1, n_out), lambda i: (0, 0)),
            ],
            # True 2-lane output (block dims == full dims): 64x less HBM writeback
            # than the previous 128-lane padded slab.
            out_specs=pl.BlockSpec((tb, n_out), lambda i: (i, 0)),
        ),
        compiler_params=pltpu.CompilerParams(
            dimension_semantics=("parallel",),   # shard row tiles across TCs (v7x)
        ),
        cost_estimate=pl.CostEstimate(
            flops=int(flops), transcendentals=0, bytes_accessed=int(bytes_accessed)),
    )(xp, w1, b1, w2, b2, w3, b3)


@jax.jit
def vsfc_forward(x, params):
    # x: (B, 512) float32  ->  (B, 2) float32
    b, _ = x.shape
    tb, bp = _choose_tiling(b)
    if bp != b:
        # Small (<= 16 rows per tile) f32 row pad only when a ragged last tile
        # would otherwise be needed; common aligned batches pass through untouched.
        xp = jnp.pad(x, ((0, bp - b), (0, 0)))
    else:
        xp = x
    out = _pallas_vsfc(xp, params, tb)
    return out[:b]


# ---------------------------- parameters -------------------------------------

def init_params(key):
    # PyTorch nn.Linear default init: U(-1/sqrt(fan_in), 1/sqrt(fan_in)), f32.
    ks = jax.random.split(key, 6)

    def linear(kw, kb, fan_in, fan_out):
        bound = float(fan_in) ** -0.5
        w = jax.random.uniform(kw, (fan_in, fan_out), jnp.float32, -bound, bound)
        b = jax.random.uniform(kb, (1, fan_out), jnp.float32, -bound, bound)
        return w, b

    w1, b1 = linear(ks[0], ks[1], 512, 256)
    w2, b2 = linear(ks[2], ks[3], 256, 64)
    w3, b3 = linear(ks[4], ks[5], 64, 2)
    return {"w1": w1, "b1": b1, "w2": w2, "b2": b2, "w3": w3, "b3": b3}


def prepare_params(p):
    # Weights cast to bf16 once (MXU operands, half the weight HBM traffic);
    # biases stay f32 for the VPU adds.
    return {"w1": p["w1"].astype(jnp.bfloat16), "b1": p["b1"],
            "w2": p["w2"].astype(jnp.bfloat16), "b2": p["b2"],
            "w3": p["w3"].astype(jnp.bfloat16), "b3": p["b3"]}


def vsfc_reference(x, p):
    # Pure-JAX f32 reference matching the PyTorch module.
    h = jnp.maximum(x @ p["w1"] + p["b1"], 0.0)
    h = jnp.maximum(h @ p["w2"] + p["b2"], 0.0)
    return h @ p["w3"] + p["b3"]


# --------------------------------- main ---------------------------------------

if __name__ == "__main__":
    key = jax.random.PRNGKey(0)
    kx, kp = jax.random.split(key)

    batch = 4
    x = jax.random.normal(kx, (batch, 512), jnp.float32)
    params_f32 = init_params(kp)
    params = prepare_params(params_f32)

    out = vsfc_forward(x, params)                # (batch, 2)
    jax.block_until_ready(out)

    assert out.shape == (batch, 2) and out.dtype == jnp.float32
    ref = vsfc_reference(x, params_f32)
    assert bool(jnp.all(jnp.isfinite(out)))
    # bf16 MXU operands with f32 accumulation: loose tolerance vs f32 reference.
    assert bool(jnp.allclose(out, ref, atol=5e-2, rtol=5e-2))
    print("KERNEL_OK")
</pallas_src>

<mosaic_0001>
module attributes {stable_mosaic.version = 11 : i64} {
  func.func @_vsfc_kernel(%arg0: i32, %arg1: memref<4x512xf32, #tpu.memory_space<vmem>>, %arg2: memref<512x256xbf16, #tpu.memory_space<vmem>>, %arg3: memref<1x256xf32, #tpu.memory_space<vmem>>, %arg4: memref<256x64xbf16, #tpu.memory_space<vmem>>, %arg5: memref<1x64xf32, #tpu.memory_space<vmem>>, %arg6: memref<64x2xbf16, #tpu.memory_space<vmem>>, %arg7: memref<1x2xf32, #tpu.memory_space<vmem>>, %arg8: memref<4x2xf32, #tpu.memory_space<vmem>>) attributes {dimension_semantics = [#tpu.dimension_semantics<parallel>], iteration_bounds = array<i64: 1>, scalar_prefetch = 0 : i64, scratch_operands = 0 : i64, tpu.core_type = #tpu.core_type<tc>, window_params = [{transform_indices = @transform_0, window_bounds = array<i64: 4, 512>}, {pipeline_mode = #tpu.pipeline_mode<synchronous>, transform_indices = @transform_1, window_bounds = array<i64: 512, 256>}, {pipeline_mode = #tpu.pipeline_mode<synchronous>, transform_indices = @transform_2, window_bounds = array<i64: 1, 256>}, {pipeline_mode = #tpu.pipeline_mode<synchronous>, transform_indices = @transform_3, window_bounds = array<i64: 256, 64>}, {pipeline_mode = #tpu.pipeline_mode<synchronous>, transform_indices = @transform_4, window_bounds = array<i64: 1, 64>}, {pipeline_mode = #tpu.pipeline_mode<synchronous>, transform_indices = @transform_5, window_bounds = array<i64: 64, 2>}, {pipeline_mode = #tpu.pipeline_mode<synchronous>, transform_indices = @transform_6, window_bounds = array<i64: 1, 2>}, {transform_indices = @transform_7, window_bounds = array<i64: 4, 2>}]} {
    %c0 = arith.constant 0 : index
    %c0_0 = arith.constant 0 : index
    %0 = vector.load %arg1[%c0, %c0_0] : memref<4x512xf32, #tpu.memory_space<vmem>>, vector<4x512xf32>
    %1 = arith.truncf %0 : vector<4x512xf32> to vector<4x512xbf16>
    %c0_1 = arith.constant 0 : index
    %c0_2 = arith.constant 0 : index
    %2 = vector.load %arg2[%c0_1, %c0_2] : memref<512x256xbf16, #tpu.memory_space<vmem>>, vector<512x256xbf16>
    %cst = arith.constant dense<0.000000e+00> : vector<4x256xf32>
    %3 = tpu.matmul %1, %2, %cst {dimension_numbers = #tpu.dot_dimension_numbers<[1], [0], [0], [1], [0, 0, 1, 1], [], []>} : vector<4x512xbf16>, vector<512x256xbf16>, vector<4x256xf32> -> vector<4x256xf32>
    %c0_3 = arith.constant 0 : index
    %c0_4 = arith.constant 0 : index
    %4 = vector.load %arg3[%c0_3, %c0_4] : memref<1x256xf32, #tpu.memory_space<vmem>>, vector<1x256xf32>
    %5 = vector.broadcast %4 : vector<1x256xf32> to vector<4x256xf32>
    %6 = arith.addf %3, %5 : vector<4x256xf32>
    %cst_5 = arith.constant 0.000000e+00 : f32
    %7 = vector.broadcast %cst_5 : f32 to vector<4x256xf32>
    %8 = arith.maximumf %6, %7 : vector<4x256xf32>
    %9 = arith.truncf %8 : vector<4x256xf32> to vector<4x256xbf16>
    %c0_6 = arith.constant 0 : index
    %c0_7 = arith.constant 0 : index
    %10 = vector.load %arg4[%c0_6, %c0_7] : memref<256x64xbf16, #tpu.memory_space<vmem>>, vector<256x64xbf16>
    %cst_8 = arith.constant dense<0.000000e+00> : vector<4x64xf32>
    %11 = tpu.matmul %9, %10, %cst_8 {dimension_numbers = #tpu.dot_dimension_numbers<[1], [0], [0], [1], [0, 0, 1, 1], [], []>} : vector<4x256xbf16>, vector<256x64xbf16>, vector<4x64xf32> -> vector<4x64xf32>
    %c0_9 = arith.constant 0 : index
    %c0_10 = arith.constant 0 : index
    %12 = vector.load %arg5[%c0_9, %c0_10] : memref<1x64xf32, #tpu.memory_space<vmem>>, vector<1x64xf32>
    %13 = vector.broadcast %12 : vector<1x64xf32> to vector<4x64xf32>
    %14 = arith.addf %11, %13 : vector<4x64xf32>
    %cst_11 = arith.constant 0.000000e+00 : f32
    %15 = vector.broadcast %cst_11 : f32 to vector<4x64xf32>
    %16 = arith.maximumf %14, %15 : vector<4x64xf32>
    %17 = arith.truncf %16 : vector<4x64xf32> to vector<4x64xbf16>
    %c0_12 = arith.constant 0 : index
    %c0_13 = arith.constant 0 : index
    %18 = vector.load %arg6[%c0_12, %c0_13] : memref<64x2xbf16, #tpu.memory_space<vmem>>, vector<64x2xbf16>
    %cst_14 = arith.constant dense<0.000000e+00> : vector<4x2xf32>
    %19 = tpu.matmul %17, %18, %cst_14 {dimension_numbers = #tpu.dot_dimension_numbers<[1], [0], [0], [1], [0, 0, 1, 1], [], []>} : vector<4x64xbf16>, vector<64x2xbf16>, vector<4x2xf32> -> vector<4x2xf32>
    %c0_15 = arith.constant 0 : index
    %c0_16 = arith.constant 0 : index
    %20 = vector.load %arg7[%c0_15, %c0_16] : memref<1x2xf32, #tpu.memory_space<vmem>>, vector<1x2xf32>
    %21 = vector.broadcast %20 : vector<1x2xf32> to vector<4x2xf32>
    %22 = arith.addf %19, %21 : vector<4x2xf32>
    %c0_17 = arith.constant 0 : index
    %c0_18 = arith.constant 0 : index
    %23 = vector.load %arg8[%c0_17, %c0_18] : memref<4x2xf32, #tpu.memory_space<vmem>>, vector<4x2xf32>
    tpu.vector_store %arg8[%c0_17, %c0_18], %22 {strides = array<i32>} : memref<4x2xf32, #tpu.memory_space<vmem>>, vector<4x2xf32>,
    return
  }
  func.func @transform_0(%arg0: i32) -> (i32, i32) {
    %c0_i32 = arith.constant 0 : i32
    %c0_i32_0 = arith.constant 0 : i32
    return %arg0, %c0_i32 : i32, i32
  }
  func.func @transform_1(%arg0: i32) -> (i32, i32) {
    %c0_i32 = arith.constant 0 : i32
    %c0_i32_0 = arith.constant 0 : i32
    %c0_i32_1 = arith.constant 0 : i32
    return %c0_i32, %c0_i32_0 : i32, i32
  }
  func.func @transform_2(%arg0: i32) -> (i32, i32) {
    %c0_i32 = arith.constant 0 : i32
    %c0_i32_0 = arith.constant 0 : i32
    %c0_i32_1 = arith.constant 0 : i32
    return %c0_i32, %c0_i32_0 : i32, i32
  }
  func.func @transform_3(%arg0: i32) -> (i32, i32) {
    %c0_i32 = arith.constant 0 : i32
    %c0_i32_0 = arith.constant 0 : i32
    %c0_i32_1 = arith.constant 0 : i32
    return %c0_i32, %c0_i32_0 : i32, i32
  }
  func.func @transform_4(%arg0: i32) -> (i32, i32) {
    %c0_i32 = arith.constant 0 : i32
    %c0_i32_0 = arith.constant 0 : i32
    %c0_i32_1 = arith.constant 0 : i32
    return %c0_i32, %c0_i32_0 : i32, i32
  }
  func.func @transform_5(%arg0: i32) -> (i32, i32) {
    %c0_i32 = arith.constant 0 : i32
    %c0_i32_0 = arith.constant 0 : i32
    %c0_i32_1 = arith.constant 0 : i32
    return %c0_i32, %c0_i32_0 : i32, i32
  }
  func.func @transform_6(%arg0: i32) -> (i32, i32) {
    %c0_i32 = arith.constant 0 : i32
    %c0_i32_0 = arith.constant 0 : i32
    %c0_i32_1 = arith.constant 0 : i32
    return %c0_i32, %c0_i32_0 : i32, i32
  }
  func.func @transform_7(%arg0: i32) -> (i32, i32) {
    %c0_i32 = arith.constant 0 : i32
    %c0_i32_0 = arith.constant 0 : i32
    return %arg0, %c0_i32 : i32, i32
  }
}

</mosaic_0001>

<llo_original>
// kernel: vsfc_forward.1
$region0: #{vsfc_forward.1}
  #allocation0 [shape = 'u32[]', space=smem, size = 0x4, offset = 0x4, fixed_abs, tag = 'smem constant byte address 0x4 - core index']
  #allocation1 [shape = 'u32[144,128]{1,0:T(1,128)}', space=vmem, size = 0x12000, scoped, tag = 'internal scratch']
  %s0 = inlined_call_operand.vmem [shape: f32[4,512], index: 0, kind: input, shape index: {}]
  %s1 = inlined_call_operand.hbm [shape: bf16[512,256], index: 1, kind: input, shape index: {}]
  %s2 = inlined_call_operand.vmem [shape: f32[1,256], index: 2, kind: input, shape index: {}]
  %s3 = inlined_call_operand.vmem [shape: bf16[256,64], index: 3, kind: input, shape index: {}]
  %s4 = inlined_call_operand.vmem [shape: f32[1,64], index: 4, kind: input, shape index: {}]
  %s5 = inlined_call_operand.vmem [shape: bf16[64,2], index: 5, kind: input, shape index: {}]
  %s6 = inlined_call_operand.vmem [shape: f32[1,2], index: 6, kind: input, shape index: {}]
  %s7 = inlined_call_operand.vmem [shape: f32[4,2], index: 7, kind: output, shape index: {}]
  %s8 = sld [smem:[#allocation0]]
  $region42: #{vsfc_forward.1} parent=0
    _
  %s10 = ssub.s32 1, %s8
  %s11 = scalar_select 0, %s10, %s8
  $region1: #{vsfc_forward.1} parent=0
    #allocation2 [shape = 'u8[262144]{0}', space=vmem, size = 0x40000, scoped, tag = 'input window, operand 1, single buffered']
    #allocation3 [shape = 's32[1]{0}', space=sflag, size = 0x4, scoped, tag = 'scoped memory for vsfc_forward.1']
    %12 = vsyncpa [#allocation3], 0
    // Predicated region
    $region2: #{vsfc_forward.1} parent=1 // pred_check
      _
    $region3: #{vsfc_forward.1} parent=1 // pred_check_branch
      %14 = sbr.rel (0) target = $region5
    $region4: #{vsfc_forward.1} parent=1 // pred_region
      _
    $region5: #{vsfc_forward.1} parent=1 // pred_fallthru
      _
    // Predicated region
    $region6: #{vsfc_forward.1} parent=1 // pred_check
      _
    $region7: #{vsfc_forward.1} parent=1 // pred_check_branch
      %16 = sbr.rel (0) target = $region9
    $region8: #{vsfc_forward.1} parent=1 // pred_region
      %s18 = ssub.s32 8192, 8192
      %19 = vsyncadd [#allocation3], %s18
      %s20 = sshll.u32 [#allocation2], 4
      %s21 = int_to_ptr.vmem [resolvable:$true] %s20
      %26 = dma.hbm_to_vmem [thread:$0]  %s1, 8192, %s21, [#allocation3], 128, 128, 8
    $region9: #{vsfc_forward.1} parent=1 // pred_fallthru
      _
    // Predicated region
    $region10: #{vsfc_forward.1} parent=1 // pred_check
      _
    $region11: #{vsfc_forward.1} parent=1 // pred_check_branch
      %28 = sbr.rel (0) target = $region13
    $region12: #{vsfc_forward.1} parent=1 // pred_region
      _
    $region13: #{vsfc_forward.1} parent=1 // pred_fallthru
      _
    // Predicated region
    $region14: #{vsfc_forward.1} parent=1 // pred_check
      _
    $region15: #{vsfc_forward.1} parent=1 // pred_check_branch
      %30 = sbr.rel (0) target = $region17
    $region16: #{vsfc_forward.1} parent=1 // pred_region
      _
    $region17: #{vsfc_forward.1} parent=1 // pred_fallthru
      _
    // Predicated region
    $region18: #{vsfc_forward.1} parent=1 // pred_check
      _
    $region19: #{vsfc_forward.1} parent=1 // pred_check_branch
      %32 = sbr.rel (0) target = $region21
    $region20: #{vsfc_forward.1} parent=1 // pred_region
      _
    $region21: #{vsfc_forward.1} parent=1 // pred_fallthru
      _
    // Predicated region
    $region22: #{vsfc_forward.1} parent=1 // pred_check
      _
    $region23: #{vsfc_forward.1} parent=1 // pred_check_branch
      %34 = sbr.rel (0) target = $region25
    $region24: #{vsfc_forward.1} parent=1 // pred_region
      _
    $region25: #{vsfc_forward.1} parent=1 // pred_fallthru
      _
    // Predicated region
    $region26: #{vsfc_forward.1} parent=1 // pred_check
      _
    $region27: #{vsfc_forward.1} parent=1 // pred_check_branch
      %36 = sbr.rel (0) target = $region29
    $region28: #{vsfc_forward.1} parent=1 // pred_region
      _
    $region29: #{vsfc_forward.1} parent=1 // pred_fallthru
      _
    // Predicated region
    $region30: #{vsfc_forward.1} parent=1 // pred_check
      _
    $region31: #{vsfc_forward.1} parent=1 // pred_check_branch
      %38 = sbr.rel (0) target = $region33
    $region32: #{vsfc_forward.1} parent=1 // pred_region
      %39 = dma.done [#allocation3], 8192
    $region33: #{vsfc_forward.1} parent=1 // pred_fallthru
      _
    %v41 = vld [vmem:[%s0] sm:$0xff]
    %v42 = vld [vmem:[%s0 + $0x8] sm:$0xff]
    %v45 = vcombine.high %v41, %v41
    %v46 = vcombine.high %v42, %v42
    %v49 = vpack.c.bf16 %v41, %v41
    %v50 = vpack.c.bf16 %v45, %v45
    %v51 = vpack.c.bf16 %v42, %v42
    %v52 = vpack.c.bf16 %v46, %v46
    %v53 = vld [vmem:[#allocation2] sm:$0xff]
    %v54 = vld [vmem:[#allocation2 + $0x8] sm:$0xff]
    %v55 = vld [vmem:[#allocation2 + $0x10] sm:$0xff]
    %v56 = vld [vmem:[#allocation2 + $0x18] sm:$0xff]
    %v57 = vld [vmem:[#allocation2 + $0x20] sm:$0xff]
    %v58 = vld [vmem:[#allocation2 + $0x28] sm:$0xff]
    %v59 = vld [vmem:[#allocation2 + $0x30] sm:$0xff]
    %v60 = vld [vmem:[#allocation2 + $0x38] sm:$0xff]
    %v61 = vld [vmem:[#allocation2 + $0x40] sm:$0xff]
    %v62 = vld [vmem:[#allocation2 + $0x48] sm:$0xff]
    %v63 = vld [vmem:[#allocation2 + $0x50] sm:$0xff]
    %v64 = vld [vmem:[#allocation2 + $0x58] sm:$0xff]
    %v65 = vld [vmem:[#allocation2 + $0x60] sm:$0xff]
    %v66 = vld [vmem:[#allocation2 + $0x68] sm:$0xff]
    %v67 = vld [vmem:[#allocation2 + $0x70] sm:$0xff]
    %v68 = vld [vmem:[#allocation2 + $0x78] sm:$0xff]
    %v69 = vld [vmem:[#allocation2 + $0x80] sm:$0xff]
    %v70 = vld [vmem:[#allocation2 + $0x88] sm:$0xff]
    %v71 = vld [vmem:[#allocation2 + $0x90] sm:$0xff]
    %v72 = vld [vmem:[#allocation2 + $0x98] sm:$0xff]
    %v73 = vld [vmem:[#allocation2 + $0xa0] sm:$0xff]
    %v74 = vld [vmem:[#allocation2 + $0xa8] sm:$0xff]
    %v75 = vld [vmem:[#allocation2 + $0xb0] sm:$0xff]
    %v76 = vld [vmem:[#allocation2 + $0xb8] sm:$0xff]
    %v77 = vld [vmem:[#allocation2 + $0xc0] sm:$0xff]
    %v78 = vld [vmem:[#allocation2 + $0xc8] sm:$0xff]
    %v79 = vld [vmem:[#allocation2 + $0xd0] sm:$0xff]
    %v80 = vld [vmem:[#allocation2 + $0xd8] sm:$0xff]
    %v81 = vld [vmem:[#allocation2 + $0xe0] sm:$0xff]
    %v82 = vld [vmem:[#allocation2 + $0xe8] sm:$0xff]
    %v83 = vld [vmem:[#allocation2 + $0xf0] sm:$0xff]
    %v84 = vld [vmem:[#allocation2 + $0xf8] sm:$0xff]
    %v85 = vld [vmem:[#allocation2 + $0x100] sm:$0xff]
    %v86 = vld [vmem:[#allocation2 + $0x108] sm:$0xff]
    %v87 = vld [vmem:[#allocation2 + $0x110] sm:$0xff]
    %v88 = vld [vmem:[#allocation2 + $0x118] sm:$0xff]
    %v89 = vld [vmem:[#allocation2 + $0x120] sm:$0xff]
    %v90 = vld [vmem:[#allocation2 + $0x128] sm:$0xff]
    %v91 = vld [vmem:[#allocation2 + $0x130] sm:$0xff]
    %v92 = vld [vmem:[#allocation2 + $0x138] sm:$0xff]
    %v93 = vld [vmem:[#allocation2 + $0x140] sm:$0xff]
    %v94 = vld [vmem:[#allocation2 + $0x148] sm:$0xff]
    %v95 = vld [vmem:[#allocation2 + $0x150] sm:$0xff]
    %v96 = vld [vmem:[#allocation2 + $0x158] sm:$0xff]
    %v97 = vld [vmem:[#allocation2 + $0x160] sm:$0xff]
    %v98 = vld [vmem:[#allocation2 + $0x168] sm:$0xff]
    %v99 = vld [vmem:[#allocation2 + $0x170] sm:$0xff]
    %v100 = vld [vmem:[#allocation2 + $0x178] sm:$0xff]
    %v101 = vld [vmem:[#allocation2 + $0x180] sm:$0xff]
    %v102 = vld [vmem:[#allocation2 + $0x188] sm:$0xff]
    %v103 = vld [vmem:[#allocation2 + $0x190] sm:$0xff]
    %v104 = vld [vmem:[#allocation2 + $0x198] sm:$0xff]
    %v105 = vld [vmem:[#allocation2 + $0x1a0] sm:$0xff]
    %v106 = vld [vmem:[#allocation2 + $0x1a8] sm:$0xff]
    %v107 = vld [vmem:[#allocation2 + $0x1b0] sm:$0xff]
    %v108 = vld [vmem:[#allocation2 + $0x1b8] sm:$0xff]
    %v109 = vld [vmem:[#allocation2 + $0x1c0] sm:$0xff]
    %v110 = vld [vmem:[#allocation2 + $0x1c8] sm:$0xff]
    %v111 = vld [vmem:[#allocation2 + $0x1d0] sm:$0xff]
    %v112 = vld [vmem:[#allocation2 + $0x1d8] sm:$0xff]
    %v113 = vld [vmem:[#allocation2 + $0x1e0] sm:$0xff]
    %v114 = vld [vmem:[#allocation2 + $0x1e8] sm:$0xff]
    %v115 = vld [vmem:[#allocation2 + $0x1f0] sm:$0xff]
    %v116 = vld [vmem:[#allocation2 + $0x1f8] sm:$0xff]
    %v117 = vld [vmem:[%s2] sm:$0x3]
    %v119 = vlaneseq
    %v120 = vshrl.u32 %v119, 7
    %v121 = vsub.s32 0, %v120
    %v122 = vrot.slane %v117, %v121
    %v123 = vlaneseq
    %v124 = vshrl.u32 %v123, 7
    %v125 = vsub.s32 1, %v124
    %v126 = vrot.slane %v117, %v125
    %v193 = vunpack.c.l.b16 %v53
    %v194 = vunpack.c.h.b16 %v53
    %v195 = vunpack.c.l.b16 %v54
    %v196 = vunpack.c.h.b16 %v54
    %v197 = vunpack.c.l.b16 %v55
    %v198 = vunpack.c.h.b16 %v55
    %v199 = vunpack.c.l.b16 %v56
    %v200 = vunpack.c.h.b16 %v56
    %v201 = vunpack.c.l.b16 %v57
    %v202 = vunpack.c.h.b16 %v57
    %v203 = vunpack.c.l.b16 %v58
    %v204 = vunpack.c.h.b16 %v58
    %v205 = vunpack.c.l.b16 %v59
    %v206 = vunpack.c.h.b16 %v59
    %v207 = vunpack.c.l.b16 %v60
    %v208 = vunpack.c.h.b16 %v60
    %v209 = vunpack.c.l.b16 %v61
    %v210 = vunpack.c.h.b16 %v61
    %v211 = vunpack.c.l.b16 %v62
    %v212 = vunpack.c.h.b16 %v62
    %v213 = vunpack.c.l.b16 %v63
    %v214 = vunpack.c.h.b16 %v63
    %v215 = vunpack.c.l.b16 %v64
    %v216 = vunpack.c.h.b16 %v64
    %v217 = vunpack.c.l.b16 %v65
    %v218 = vunpack.c.h.b16 %v65
    %v219 = vunpack.c.l.b16 %v66
    %v220 = vunpack.c.h.b16 %v66
    %v221 = vunpack.c.l.b16 %v67
    %v222 = vunpack.c.h.b16 %v67
    %v223 = vunpack.c.l.b16 %v68
    %v224 = vunpack.c.h.b16 %v68
    %v225 = vunpack.c.l.b16 %v69
    %v226 = vunpack.c.h.b16 %v69
    %v227 = vunpack.c.l.b16 %v70
    %v228 = vunpack.c.h.b16 %v70
    %v229 = vunpack.c.l.b16 %v71
    %v230 = vunpack.c.h.b16 %v71
    %v231 = vunpack.c.l.b16 %v72
    %v232 = vunpack.c.h.b16 %v72
    %v233 = vunpack.c.l.b16 %v73
    %v234 = vunpack.c.h.b16 %v73
    %v235 = vunpack.c.l.b16 %v74
    %v236 = vunpack.c.h.b16 %v74
    %v237 = vunpack.c.l.b16 %v75
    %v238 = vunpack.c.h.b16 %v75
    %v239 = vunpack.c.l.b16 %v76
    %v240 = vunpack.c.h.b16 %v76
    %v241 = vunpack.c.l.b16 %v77
    %v242 = vunpack.c.h.b16 %v77
    %v243 = vunpack.c.l.b16 %v78
    %v244 = vunpack.c.h.b16 %v78
    %v245 = vunpack.c.l.b16 %v79
    %v246 = vunpack.c.h.b16 %v79
    %v247 = vunpack.c.l.b16 %v80
    %v248 = vunpack.c.h.b16 %v80
    %v249 = vunpack.c.l.b16 %v81
    %v250 = vunpack.c.h.b16 %v81
    %v251 = vunpack.c.l.b16 %v82
    %v252 = vunpack.c.h.b16 %v82
    %v253 = vunpack.c.l.b16 %v83
    %v254 = vunpack.c.h.b16 %v83
    %v255 = vunpack.c.l.b16 %v84
    %v256 = vunpack.c.h.b16 %v84
    %v257 = vunpack.c.l.b16 %v85
    %v258 = vunpack.c.h.b16 %v85
    %v259 = vunpack.c.l.b16 %v86
    %v260 = vunpack.c.h.b16 %v86
    %v261 = vunpack.c.l.b16 %v87
    %v262 = vunpack.c.h.b16 %v87
    %v263 = vunpack.c.l.b16 %v88
    %v264 = vunpack.c.h.b16 %v88
    %v265 = vunpack.c.l.b16 %v89
    %v266 = vunpack.c.h.b16 %v89
    %v267 = vunpack.c.l.b16 %v90
    %v268 = vunpack.c.h.b16 %v90
    %v269 = vunpack.c.l.b16 %v91
    %v270 = vunpack.c.h.b16 %v91
    %v271 = vunpack.c.l.b16 %v92
    %v272 = vunpack.c.h.b16 %v92
    %v273 = vunpack.c.l.b16 %v93
    %v274 = vunpack.c.h.b16 %v93
    %v275 = vunpack.c.l.b16 %v94
    %v276 = vunpack.c.h.b16 %v94
    %v277 = vunpack.c.l.b16 %v95
    %v278 = vunpack.c.h.b16 %v95
    %v279 = vunpack.c.l.b16 %v96
    %v280 = vunpack.c.h.b16 %v96
    %v281 = vunpack.c.l.b16 %v97
    %v282 = vunpack.c.h.b16 %v97
    %v283 = vunpack.c.l.b16 %v98
    %v284 = vunpack.c.h.b16 %v98
    %v285 = vunpack.c.l.b16 %v99
    %v286 = vunpack.c.h.b16 %v99
    %v287 = vunpack.c.l.b16 %v100
    %v288 = vunpack.c.h.b16 %v100
    %v289 = vunpack.c.l.b16 %v101
    %v290 = vunpack.c.h.b16 %v101
    %v291 = vunpack.c.l.b16 %v102
    %v292 = vunpack.c.h.b16 %v102
    %v293 = vunpack.c.l.b16 %v103
    %v294 = vunpack.c.h.b16 %v103
    %v295 = vunpack.c.l.b16 %v104
    %v296 = vunpack.c.h.b16 %v104
    %v297 = vunpack.c.l.b16 %v105
    %v298 = vunpack.c.h.b16 %v105
    %v299 = vunpack.c.l.b16 %v106
    %v300 = vunpack.c.h.b16 %v106
    %v301 = vunpack.c.l.b16 %v107
    %v302 = vunpack.c.h.b16 %v107
    %v303 = vunpack.c.l.b16 %v108
    %v304 = vunpack.c.h.b16 %v108
    %v305 = vunpack.c.l.b16 %v109
    %v306 = vunpack.c.h.b16 %v109
    %v307 = vunpack.c.l.b16 %v110
    %v308 = vunpack.c.h.b16 %v110
    %v309 = vunpack.c.l.b16 %v111
    %v310 = vunpack.c.h.b16 %v111
    %v311 = vunpack.c.l.b16 %v112
    %v312 = vunpack.c.h.b16 %v112
    %v313 = vunpack.c.l.b16 %v113
    %v314 = vunpack.c.h.b16 %v113
    %v315 = vunpack.c.l.b16 %v114
    %v316 = vunpack.c.h.b16 %v114
    %v317 = vunpack.c.l.b16 %v115
    %v318 = vunpack.c.h.b16 %v115
    %v319 = vunpack.c.l.b16 %v116
    %v320 = vunpack.c.h.b16 %v116
    %v321 = vpack.c.b16 %v195, %v193
    %v322 = vpack.c.b16 %v196, %v194
    %v323 = vpack.c.b16 %v199, %v197
    %v324 = vpack.c.b16 %v200, %v198
    %v325 = vpack.c.b16 %v203, %v201
    %v326 = vpack.c.b16 %v204, %v202
    %v327 = vpack.c.b16 %v207, %v205
    %v328 = vpack.c.b16 %v208, %v206
    %v329 = vpack.c.b16 %v211, %v209
    %v330 = vpack.c.b16 %v212, %v210
    %v331 = vpack.c.b16 %v215, %v213
    %v332 = vpack.c.b16 %v216, %v214
    %v333 = vpack.c.b16 %v219, %v217
    %v334 = vpack.c.b16 %v220, %v218
    %v335 = vpack.c.b16 %v223, %v221
    %v336 = vpack.c.b16 %v224, %v222
    %v337 = vpack.c.b16 %v227, %v225
    %v338 = vpack.c.b16 %v228, %v226
    %v339 = vpack.c.b16 %v231, %v229
    %v340 = vpack.c.b16 %v232, %v230
    %v341 = vpack.c.b16 %v235, %v233
    %v342 = vpack.c.b16 %v236, %v234
    %v343 = vpack.c.b16 %v239, %v237
    %v344 = vpack.c.b16 %v240, %v238
    %v345 = vpack.c.b16 %v243, %v241
    %v346 = vpack.c.b16 %v244, %v242
    %v347 = vpack.c.b16 %v247, %v245
    %v348 = vpack.c.b16 %v248, %v246
    %v349 = vpack.c.b16 %v251, %v249
    %v350 = vpack.c.b16 %v252, %v250
    %v351 = vpack.c.b16 %v255, %v253
    %v352 = vpack.c.b16 %v256, %v254
    %v353 = vpack.c.b16 %v259, %v257
    %v354 = vpack.c.b16 %v260, %v258
    %v355 = vpack.c.b16 %v263, %v261
    %v356 = vpack.c.b16 %v264, %v262
    %v357 = vpack.c.b16 %v267, %v265
    %v358 = vpack.c.b16 %v268, %v266
    %v359 = vpack.c.b16 %v271, %v269
    %v360 = vpack.c.b16 %v272, %v270
    %v361 = vpack.c.b16 %v275, %v273
    %v362 = vpack.c.b16 %v276, %v274
    %v363 = vpack.c.b16 %v279, %v277
    %v364 = vpack.c.b16 %v280, %v278
    %v365 = vpack.c.b16 %v283, %v281
    %v366 = vpack.c.b16 %v284, %v282
    %v367 = vpack.c.b16 %v287, %v285
    %v368 = vpack.c.b16 %v288, %v286
    %v369 = vpack.c.b16 %v291, %v289
    %v370 = vpack.c.b16 %v292, %v290
    %v371 = vpack.c.b16 %v295, %v293
    %v372 = vpack.c.b16 %v296, %v294
    %v373 = vpack.c.b16 %v299, %v297
    %v374 = vpack.c.b16 %v300, %v298
    %v375 = vpack.c.b16 %v303, %v301
    %v376 = vpack.c.b16 %v304, %v302
    %v377 = vpack.c.b16 %v307, %v305
    %v378 = vpack.c.b16 %v308, %v306
    %v379 = vpack.c.b16 %v311, %v309
    %v380 = vpack.c.b16 %v312, %v310
    %v381 = vpack.c.b16 %v315, %v313
    %v382 = vpack.c.b16 %v316, %v314
    %v383 = vpack.c.b16 %v319, %v317
    %v384 = vpack.c.b16 %v320, %v318
    %449 = vmatprep.subr.bf16.mxu0 %v322
    %450 = vmatpush1.bf16.msra.mxu0 %v321
    %451 = vmatprep.subr.bf16.mxu0 %v324
    %452 = vmatpush1.bf16.msra.mxu0 %v323
    %453 = vmatprep.subr.bf16.mxu0 %v326
    %454 = vmatpush1.bf16.msra.mxu0 %v325
    %455 = vmatprep.subr.bf16.mxu0 %v328
    %456 = vmatpush1.bf16.msra.mxu0 %v327
    %457 = vmatprep.subr.bf16.mxu0 %v330
    %458 = vmatpush1.bf16.msra.mxu0 %v329
    %459 = vmatprep.subr.bf16.mxu0 %v332
    %460 = vmatpush1.bf16.msra.mxu0 %v331
    %461 = vmatprep.subr.bf16.mxu0 %v334
    %462 = vmatpush1.bf16.msra.mxu0 %v333
    %463 = vmatprep.subr.bf16.mxu0 %v336
    %464 = vmatpush1.bf16.msra.mxu0 %v335
    %465 = vmatprep.subr.bf16.mxu0 %v338
    %466 = vmatpush1.bf16.msra.mxu0 %v337
    %467 = vmatprep.subr.bf16.mxu0 %v340
    %468 = vmatpush1.bf16.msra.mxu0 %v339
    %469 = vmatprep.subr.bf16.mxu0 %v342
    %470 = vmatpush1.bf16.msra.mxu0 %v341
    %471 = vmatprep.subr.bf16.mxu0 %v344
    %472 = vmatpush1.bf16.msra.mxu0 %v343
    %473 = vmatprep.subr.bf16.mxu0 %v346
    %474 = vmatpush1.bf16.msra.mxu0 %v345
    %475 = vmatprep.subr.bf16.mxu0 %v348
    %476 = vmatpush1.bf16.msra.mxu0 %v347
    %477 = vmatprep.subr.bf16.mxu0 %v350
    %478 = vmatpush1.bf16.msra.mxu0 %v349
    %479 = vmatprep.subr.bf16.mxu0 %v352
    %480 = vmatpush1.bf16.msra.mxu0 %v351
    %481 = vmatprep.mubr.bf16.mxu0 %v50
    %482 = vmatmul.mubr.bf16.gmra.mrb[0].mxu0 %v49
    %v483 = vpop.f32.mrb[0].mxu0
    %v484 = vadd.f32 %v122, %v483
    %v485 = vpop.f32.mrb[0].mxu0
    %v486 = vadd.f32 %v126, %v485
    %v487 = vpop.f32.mrb[0].mxu0
    %v488 = vpop.f32.mrb[0].mxu0
    %489 = vdwg.mxu0
    %490 = vmatprep.subr.bf16.mxu0 %v354
    %491 = vmatpush1.bf16.msra.mxu0 %v353
    %492 = vmatprep.subr.bf16.mxu0 %v356
    %493 = vmatpush1.bf16.msra.mxu0 %v355
    %494 = vmatprep.subr.bf16.mxu0 %v358
    %495 = vmatpush1.bf16.msra.mxu0 %v357
    %496 = vmatprep.subr.bf16.mxu0 %v360
    %497 = vmatpush1.bf16.msra.mxu0 %v359
    %498 = vmatprep.subr.bf16.mxu0 %v362
    %499 = vmatpush1.bf16.msra.mxu0 %v361
    %500 = vmatprep.subr.bf16.mxu0 %v364
    %501 = vmatpush1.bf16.msra.mxu0 %v363
    %502 = vmatprep.subr.bf16.mxu0 %v366
    %503 = vmatpush1.bf16.msra.mxu0 %v365
    %504 = vmatprep.subr.bf16.mxu0 %v368
    %505 = vmatpush1.bf16.msra.mxu0 %v367
    %506 = vmatprep.subr.bf16.mxu0 %v370
    %507 = vmatpush1.bf16.msra.mxu0 %v369
    %508 = vmatprep.subr.bf16.mxu0 %v372
    %509 = vmatpush1.bf16.msra.mxu0 %v371
    %510 = vmatprep.subr.bf16.mxu0 %v374
    %511 = vmatpush1.bf16.msra.mxu0 %v373
    %512 = vmatprep.subr.bf16.mxu0 %v376
    %513 = vmatpush1.bf16.msra.mxu0 %v375
    %514 = vmatprep.subr.bf16.mxu0 %v378
    %515 = vmatpush1.bf16.msra.mxu0 %v377
    %516 = vmatprep.subr.bf16.mxu0 %v380
    %517 = vmatpush1.bf16.msra.mxu0 %v379
    %518 = vmatprep.subr.bf16.mxu0 %v382
    %519 = vmatpush1.bf16.msra.mxu0 %v381
    %520 = vmatprep.subr.bf16.mxu0 %v384
    %521 = vmatpush1.bf16.msra.mxu0 %v383
    %522 = vmatprep.mubr.bf16.mxu0 %v52
    %523 = vmatmul.mubr.bf16.gmra.mrb[0].mxu0 %v51
    %v524 = vpop.f32.mrb[0].mxu0
    %v525 = vadd.f32 %v484, %v524
    %v526 = vpop.f32.mrb[0].mxu0
    %v527 = vadd.f32 %v486, %v526
    %v528 = vpop.f32.mrb[0].mxu0
    %v529 = vpop.f32.mrb[0].mxu0
    %530 = vdwg.mxu0
    %v531 = vmax.f32 %v525, 0.0
    %v532 = vmax.f32 %v527, 0.0
    %v533 = vpack.c.bf16 %v531, %v531
    %v534 = vpack.c.bf16 %v532, %v532
    %v535 = vld [vmem:[%s3] sm:$0xf]
    %v536 = vld [vmem:[%s3 + $0x4] sm:$0xf]
    %v537 = vld [vmem:[%s3 + $0x8] sm:$0xf]
    %v538 = vld [vmem:[%s3 + $0xc] sm:$0xf]
    %v539 = vld [vmem:[%s3 + $0x10] sm:$0xf]
    %v540 = vld [vmem:[%s3 + $0x14] sm:$0xf]
    %v541 = vld [vmem:[%s3 + $0x18] sm:$0xf]
    %v542 = vld [vmem:[%s3 + $0x1c] sm:$0xf]
    %v543 = vld [vmem:[%s3 + $0x20] sm:$0xf]
    %v544 = vld [vmem:[%s3 + $0x24] sm:$0xf]
    %v545 = vld [vmem:[%s3 + $0x28] sm:$0xf]
    %v546 = vld [vmem:[%s3 + $0x2c] sm:$0xf]
    %v547 = vld [vmem:[%s3 + $0x30] sm:$0xf]
    %v548 = vld [vmem:[%s3 + $0x34] sm:$0xf]
    %v549 = vld [vmem:[%s3 + $0x38] sm:$0xf]
    %v550 = vld [vmem:[%s3 + $0x3c] sm:$0xf]
    %v551 = vld [vmem:[%s3 + $0x40] sm:$0xf]
    %v552 = vld [vmem:[%s3 + $0x44] sm:$0xf]
    %v553 = vld [vmem:[%s3 + $0x48] sm:$0xf]
    %v554 = vld [vmem:[%s3 + $0x4c] sm:$0xf]
    %v555 = vld [vmem:[%s3 + $0x50] sm:$0xf]
    %v556 = vld [vmem:[%s3 + $0x54] sm:$0xf]
    %v557 = vld [vmem:[%s3 + $0x58] sm:$0xf]
    %v558 = vld [vmem:[%s3 + $0x5c] sm:$0xf]
    %v559 = vld [vmem:[%s3 + $0x60] sm:$0xf]
    %v560 = vld [vmem:[%s3 + $0x64] sm:$0xf]
    %v561 = vld [vmem:[%s3 + $0x68] sm:$0xf]
    %v562 = vld [vmem:[%s3 + $0x6c] sm:$0xf]
    %v563 = vld [vmem:[%s3 + $0x70] sm:$0xf]
    %v564 = vld [vmem:[%s3 + $0x74] sm:$0xf]
    %v565 = vld [vmem:[%s3 + $0x78] sm:$0xf]
    %v566 = vld [vmem:[%s3 + $0x7c] sm:$0xf]
    %v567 = vld [vmem:[%s4] sm:$0x1]
    %v569 = vlaneseq
    %v570 = vshrl.u32 %v569, 7
    %v571 = vsub.s32 0, %v570
    %v572 = vrot.slane %v567, %v571
    %v606 = vunpack.c.l.b16 %v535
    %v607 = vunpack.c.l.b16 %v536
    %v608 = vunpack.c.l.b16 %v537
    %v609 = vunpack.c.l.b16 %v538
    %v610 = vunpack.c.l.b16 %v539
    %v611 = vunpack.c.l.b16 %v540
    %v612 = vunpack.c.l.b16 %v541
    %v613 = vunpack.c.l.b16 %v542
    %v614 = vunpack.c.l.b16 %v543
    %v615 = vunpack.c.l.b16 %v544
    %v616 = vunpack.c.l.b16 %v545
    %v617 = vunpack.c.l.b16 %v546
    %v618 = vunpack.c.l.b16 %v547
    %v619 = vunpack.c.l.b16 %v548
    %v620 = vunpack.c.l.b16 %v549
    %v621 = vunpack.c.l.b16 %v550
    %v622 = vunpack.c.l.b16 %v551
    %v623 = vunpack.c.l.b16 %v552
    %v624 = vunpack.c.l.b16 %v553
    %v625 = vunpack.c.l.b16 %v554
    %v626 = vunpack.c.l.b16 %v555
    %v627 = vunpack.c.l.b16 %v556
    %v628 = vunpack.c.l.b16 %v557
    %v629 = vunpack.c.l.b16 %v558
    %v630 = vunpack.c.l.b16 %v559
    %v631 = vunpack.c.l.b16 %v560
    %v632 = vunpack.c.l.b16 %v561
    %v633 = vunpack.c.l.b16 %v562
    %v634 = vunpack.c.l.b16 %v563
    %v635 = vunpack.c.l.b16 %v564
    %v636 = vunpack.c.l.b16 %v565
    %v637 = vunpack.c.l.b16 %v566
    %v638 = vpack.c.b16 %v607, %v606
    %v639 = vpack.c.b16 %v609, %v608
    %v640 = vpack.c.b16 %v611, %v610
    %v641 = vpack.c.b16 %v613, %v612
    %v642 = vpack.c.b16 %v615, %v614
    %v643 = vpack.c.b16 %v617, %v616
    %v644 = vpack.c.b16 %v619, %v618
    %v645 = vpack.c.b16 %v621, %v620
    %v646 = vpack.c.b16 %v623, %v622
    %v647 = vpack.c.b16 %v625, %v624
    %v648 = vpack.c.b16 %v627, %v626
    %v649 = vpack.c.b16 %v629, %v628
    %v650 = vpack.c.b16 %v631, %v630
    %v651 = vpack.c.b16 %v633, %v632
    %v652 = vpack.c.b16 %v635, %v634
    %v653 = vpack.c.b16 %v637, %v636
    %670 = vmatprep.subr.bf16.mxu0 0
    %671 = vmatpush1.bf16.msra.mxu0 %v638
    %672 = vmatprep.subr.bf16.mxu0 0
    %673 = vmatpush1.bf16.msra.mxu0 %v639
    %674 = vmatprep.subr.bf16.mxu0 0
    %675 = vmatpush1.bf16.msra.mxu0 %v640
    %676 = vmatprep.subr.bf16.mxu0 0
    %677 = vmatpush1.bf16.msra.mxu0 %v641
    %678 = vmatprep.subr.bf16.mxu0 0
    %679 = vmatpush1.bf16.msra.mxu0 %v642
    %680 = vmatprep.subr.bf16.mxu0 0
    %681 = vmatpush1.bf16.msra.mxu0 %v643
    %682 = vmatprep.subr.bf16.mxu0 0
    %683 = vmatpush1.bf16.msra.mxu0 %v644
    %684 = vmatprep.subr.bf16.mxu0 0
    %685 = vmatpush1.bf16.msra.mxu0 %v645
    %686 = vmatprep.subr.bf16.mxu0 0
    %687 = vmatpush1.bf16.msra.mxu0 %v646
    %688 = vmatprep.subr.bf16.mxu0 0
    %689 = vmatpush1.bf16.msra.mxu0 %v647
    %690 = vmatprep.subr.bf16.mxu0 0
    %691 = vmatpush1.bf16.msra.mxu0 %v648
    %692 = vmatprep.subr.bf16.mxu0 0
    %693 = vmatpush1.bf16.msra.mxu0 %v649
    %694 = vmatprep.subr.bf16.mxu0 0
    %695 = vmatpush1.bf16.msra.mxu0 %v650
    %696 = vmatprep.subr.bf16.mxu0 0
    %697 = vmatpush1.bf16.msra.mxu0 %v651
    %698 = vmatprep.subr.bf16.mxu0 0
    %699 = vmatpush1.bf16.msra.mxu0 %v652
    %700 = vmatprep.subr.bf16.mxu0 0
    %701 = vmatpush1.bf16.msra.mxu0 %v653
    %702 = vmatprep.mubr.bf16.mxu0 %v534
    %703 = vmatmul.mubr.bf16.gmra.mrb[0].mxu0 %v533
    %v704 = vpop.f32.mrb[0].mxu0
    %v705 = vadd.f32 %v572, %v704
    %v706 = vpop.f32.mrb[0].mxu0
    %v707 = vpop.f32.mrb[0].mxu0
    %v708 = vpop.f32.mrb[0].mxu0
    %709 = vdwg.mxu0
    %v710 = vmax.f32 %v705, 0.0
    %v711 = vpack.c.bf16 %v710, %v710
    %v712 = vld [vmem:[%s5] sm:$0xf]
    %v713 = vld [vmem:[%s5 + $0x4] sm:$0xf]
    %v714 = vld [vmem:[%s5 + $0x8] sm:$0xf]
    %v715 = vld [vmem:[%s5 + $0xc] sm:$0xf]
    %v716 = vld [vmem:[%s5 + $0x10] sm:$0xf]
    %v717 = vld [vmem:[%s5 + $0x14] sm:$0xf]
    %v718 = vld [vmem:[%s5 + $0x18] sm:$0xf]
    %v719 = vld [vmem:[%s5 + $0x1c] sm:$0xf]
    %v720 = vld [vmem:[%s6] sm:$0x1]
    %v722 = vlaneseq
    %v723 = vshrl.u32 %v722, 7
    %v724 = vsub.s32 0, %v723
    %v725 = vrot.slane %v720, %v724
    %v735 = vunpack.c.l.b16 %v712
    %v736 = vunpack.c.l.b16 %v713
    %v737 = vunpack.c.l.b16 %v714
    %v738 = vunpack.c.l.b16 %v715
    %v739 = vunpack.c.l.b16 %v716
    %v740 = vunpack.c.l.b16 %v717
    %v741 = vunpack.c.l.b16 %v718
    %v742 = vunpack.c.l.b16 %v719
    %v743 = vpack.c.b16 %v736, %v735
    %v744 = vpack.c.b16 %v738, %v737
    %v745 = vpack.c.b16 %v740, %v739
    %v746 = vpack.c.b16 %v742, %v741
    %vm751 = vcmask 523264
    %v753 = vsel %vm751, %v711, 0
    %755 = vmatprep.subr.bf16.mxu0 0
    %756 = vmatpush1.bf16.msra.mxu0 %v743
    %757 = vmatprep.subr.bf16.mxu0 0
    %758 = vmatpush1.bf16.msra.mxu0 %v744
    %759 = vmatprep.subr.bf16.mxu0 0
    %760 = vmatpush1.bf16.msra.mxu0 %v745
    %761 = vmatprep.subr.bf16.mxu0 0
    %762 = vmatpush1.bf16.msra.mxu0 %v746
    %763 = vmatprep.subr.bf16.mxu0 0
    %764 = vmatpush1.bf16.msra.mxu0 0
    %765 = vmatprep.subr.bf16.mxu0 0
    %766 = vmatpush1.bf16.msra.mxu0 0
    %767 = vmatprep.subr.bf16.mxu0 0
    %768 = vmatpush1.bf16.msra.mxu0 0
    %769 = vmatprep.subr.bf16.mxu0 0
    %770 = vmatpush1.bf16.msra.mxu0 0
    %771 = vmatprep.subr.bf16.mxu0 0
    %772 = vmatpush1.bf16.msra.mxu0 0
    %773 = vmatprep.subr.bf16.mxu0 0
    %774 = vmatpush1.bf16.msra.mxu0 0
    %775 = vmatprep.subr.bf16.mxu0 0
    %776 = vmatpush1.bf16.msra.mxu0 0
    %777 = vmatprep.subr.bf16.mxu0 0
    %778 = vmatpush1.bf16.msra.mxu0 0
    %779 = vmatprep.subr.bf16.mxu0 0
    %780 = vmatpush1.bf16.msra.mxu0 0
    %781 = vmatprep.subr.bf16.mxu0 0
    %782 = vmatpush1.bf16.msra.mxu0 0
    %783 = vmatprep.subr.bf16.mxu0 0
    %784 = vmatpush1.bf16.msra.mxu0 0
    %785 = vmatprep.subr.bf16.mxu0 0
    %786 = vmatpush1.bf16.msra.mxu0 0
    %787 = vmatprep.mubr.bf16.mxu0 0
    %788 = vmatmul.mubr.bf16.gmra.mrb[0].mxu0 %v753
    %v789 = vpop.f32.mrb[0].mxu0
    %v790 = vadd.f32 %v725, %v789
    %v791 = vpop.f32.mrb[0].mxu0
    %v792 = vpop.f32.mrb[0].mxu0
    %v793 = vpop.f32.mrb[0].mxu0
    %794 = vdwg.mxu0
    %vm795 = vcmask 11264
    %796 = vst.msk [vmem:[%s7] sm:$0xf] %vm795, %v790
    // Predicated region
    $region34: #{vsfc_forward.1} parent=1 // pred_check
      _
    $region35: #{vsfc_forward.1} parent=1 // pred_check_branch
      %798 = sbr.rel (0) target = $region37
    $region36: #{vsfc_forward.1} parent=1 // pred_region
      _
    $region37: #{vsfc_forward.1} parent=1 // pred_fallthru
      _
    // Predicated region
    $region38: #{vsfc_forward.1} parent=1 // pred_check
      _
    $region39: #{vsfc_forward.1} parent=1 // pred_check_branch
      %800 = sbr.rel (0) target = $region41
    $region40: #{vsfc_forward.1} parent=1 // pred_region
      _
    $region41: #{vsfc_forward.1} parent=1 // pred_fallthru
      _
    %801 = vsyncpa [#allocation3], 1

</llo_original>
